<compile_context>
chip_gen: v6e
topology: v6e:2x2x1
jax: 0.10.0
libtpu: 0.0.40
codegen_flags: <defaults>
</compile_context>

<pallas_src>
import functools

import jax
import jax.numpy as jnp
from jax.experimental import pallas as pl
from jax.experimental.pallas import tpu as pltpu

MATMUL_DTYPE = jnp.bfloat16   # MXU operand dtype; accumulation / elementwise stay f32
LANE = 128


def _decoder_kernel(num_layers, hidden_size, embed_size,
                    ids_ref, emb_ref, h_ref, c_ref,
                    w_ref, b_ref, fc_w_ref, fc_b_ref,
                    pred_ref, h_out_ref, c_out_ref,
                    xh_ref):
    H = hidden_size
    E = embed_size
    B = h_ref.shape[1]

    # In-kernel embedding gather (ids are SMEM scalars); eval-mode dropout = identity.
    rows = [emb_ref[pl.ds(ids_ref[b], 1), :] for b in range(B)]   # B x [1, E]
    x0 = jnp.concatenate(rows, axis=0)                            # [B, E] f32
    xh_ref[:, 0:E] = x0.astype(xh_ref.dtype)

    h_new = None
    for l in range(num_layers):                                   # static unroll (L is tiny)
        h = h_ref[l]                                              # [B, H] f32 (read BEFORE write)
        c = c_ref[l]                                              # [B, H] f32
        xh_ref[:, E:] = h.astype(xh_ref.dtype)

        # One fused MXU matmul: [B, E+H](bf16) @ [E+H, 4H](bf16) -> [B, 4H] f32, + bias.
        gates = jnp.dot(xh_ref[...], w_ref[l],
                        preferred_element_type=jnp.float32) + b_ref[l]

        # Gate order was repacked to (i, f, o, g): sigmoid on 3H lanes, tanh on H lanes.
        sig = jax.nn.sigmoid(gates[:, 0:3 * H])
        g_g = jnp.tanh(gates[:, 3 * H:4 * H])
        i_g = sig[:, 0 * H:1 * H]
        f_g = sig[:, 1 * H:2 * H]
        o_g = sig[:, 2 * H:3 * H]

        c_new = f_g * c + i_g * g_g
        h_new = o_g * jnp.tanh(c_new)

        h_out_ref[l] = h_new
        c_out_ref[l] = c_new
        if l + 1 < num_layers:
            xh_ref[:, 0:E] = h_new.astype(xh_ref.dtype)           # feed next layer

    # prediction (lane-dense, O padded to a multiple of 128): [B, H] @ [H, O_pad] + b.
    pred_ref[...] = (jnp.dot(h_new.astype(fc_w_ref.dtype), fc_w_ref[...],
                             preferred_element_type=jnp.float32) + fc_b_ref[...])


@functools.partial(jax.jit, donate_argnums=(2, 3))
def decoder_forward(packed, input_ids, hidden, cell):
    """packed: pre-laid-out params (see pack_params). input_ids: [B] int32.
    hidden/cell: [L, B, H] float32 (donated -> updated in place).
    Returns (prediction [B, O], hidden [L, B, H], cell [L, B, H])."""
    emb_table = packed["embedding"]                    # [V, E] f32
    O = emb_table.shape[0]                             # output_size == vocab size
    E = emb_table.shape[1]
    L, B, H = hidden.shape
    O_pad = packed["fc_wT"].shape[1]

    kernel = functools.partial(_decoder_kernel, L, H, E)
    vspec = pl.BlockSpec(memory_space=pltpu.MemorySpace.VMEM)
    sspec = pl.BlockSpec(memory_space=pltpu.MemorySpace.SMEM)

    pred_pad, h_out, c_out = pl.pallas_call(
        kernel,
        out_shape=(
            jax.ShapeDtypeStruct((B, O_pad), jnp.float32),
            jax.ShapeDtypeStruct((L, B, H), jnp.float32),
            jax.ShapeDtypeStruct((L, B, H), jnp.float32),
        ),
        in_specs=[sspec, vspec, vspec, vspec, vspec, vspec, vspec, vspec],
        out_specs=(vspec, vspec, vspec),
        scratch_shapes=[pltpu.VMEM((B, E + H), MATMUL_DTYPE)],    # persistent xh buffer
        # In-place state update: hidden -> h_out, cell -> c_out (inputs 2,3 -> outputs 1,2).
        input_output_aliases={2: 1, 3: 2},
    )(input_ids, emb_table, hidden, cell,
      packed["w_cat"], packed["b_cat"], packed["fc_wT"], packed["fc_b"])

    return pred_pad[:, :O], h_out, c_out


def pack_params(params, matmul_dtype=MATMUL_DTYPE):
    """One-time host-side re-layout of PyTorch-style LSTM params for the kernel."""
    w_ih = params["w_ih"]                              # [L, 4H, E]  gate order i,f,g,o
    w_hh = params["w_hh"]                              # [L, 4H, H]
    L, fourH, E = w_ih.shape
    H = w_hh.shape[2]
    assert E == H, "stacked per-layer weights require embed_size == hidden_size"

    # Fused, pre-transposed gate weights: [L, E+H, 4H].
    w_cat = jnp.concatenate(
        [jnp.transpose(w_ih, (0, 2, 1)), jnp.transpose(w_hh, (0, 2, 1))], axis=1)
    # Pre-summed bias: [L, 1, 4H].
    b_cat = (params["b_ih"] + params["b_hh"])[:, None, :]

    def to_ifog(a):    # reorder gate blocks (i, f, g, o) -> (i, f, o, g) along last axis
        return jnp.concatenate(
            [a[..., 0:2 * H], a[..., 3 * H:4 * H], a[..., 2 * H:3 * H]], axis=-1)

    w_cat = to_ifog(w_cat).astype(matmul_dtype)        # bf16 MXU operands
    b_cat = to_ifog(b_cat).astype(jnp.float32)         # bias added in f32

    # Lane-dense fc: pad O to a multiple of 128; weight stored transposed [H, O_pad].
    fc_w = params["fc_w"]                              # [O, H]
    O = fc_w.shape[0]
    O_pad = ((O + LANE - 1) // LANE) * LANE
    fc_wT = jnp.zeros((H, O_pad), matmul_dtype).at[:, :O].set(fc_w.T.astype(matmul_dtype))
    fc_b = jnp.zeros((1, O_pad), jnp.float32).at[0, :O].set(params["fc_b"])

    return {
        "embedding": params["embedding"],              # [V, E] f32
        "w_cat": w_cat,                                # [L, E+H, 4H] bf16, gate order i,f,o,g
        "b_cat": b_cat,                                # [L, 1, 4H]  f32
        "fc_wT": fc_wT,                                # [H, O_pad]  bf16
        "fc_b": fc_b,                                  # [1, O_pad]  f32
    }


def decoder_forward_ref(params, input_ids, hidden, cell):
    """Pure-JAX reference matching torch.nn.LSTM + Linear semantics (PyTorch layouts, f32)."""
    x = params["embedding"][input_ids]
    L, B, H = hidden.shape
    h_out, c_out = [], []
    for l in range(L):
        gates = (x @ params["w_ih"][l].T + hidden[l] @ params["w_hh"][l].T
                 + params["b_ih"][l] + params["b_hh"][l])
        i_g = jax.nn.sigmoid(gates[:, 0 * H:1 * H])
        f_g = jax.nn.sigmoid(gates[:, 1 * H:2 * H])
        g_g = jnp.tanh(gates[:, 2 * H:3 * H])
        o_g = jax.nn.sigmoid(gates[:, 3 * H:4 * H])
        c_new = f_g * cell[l] + i_g * g_g
        h_new = o_g * jnp.tanh(c_new)
        h_out.append(h_new)
        c_out.append(c_new)
        x = h_new
    pred = x @ params["fc_w"].T + params["fc_b"]
    return pred, jnp.stack(h_out), jnp.stack(c_out)


def init_params(key, output_size, embed_size, hidden_size, num_layers):
    """PyTorch-style parameter shapes (gate order i,f,g,o)."""
    ks = jax.random.split(key, 8)
    s = 0.1
    return {
        "embedding": s * jax.random.normal(ks[0], (output_size, embed_size), jnp.float32),
        "w_ih": s * jax.random.normal(ks[1], (num_layers, 4 * hidden_size, embed_size), jnp.float32),
        "w_hh": s * jax.random.normal(ks[2], (num_layers, 4 * hidden_size, hidden_size), jnp.float32),
        "b_ih": s * jax.random.normal(ks[3], (num_layers, 4 * hidden_size), jnp.float32),
        "b_hh": s * jax.random.normal(ks[4], (num_layers, 4 * hidden_size), jnp.float32),
        "fc_w": s * jax.random.normal(ks[5], (output_size, hidden_size), jnp.float32),
        "fc_b": s * jax.random.normal(ks[6], (output_size,), jnp.float32),
    }


if __name__ == "__main__":
    OUTPUT_SIZE = 16   # vocab size
    EMBED_SIZE = 32    # == HIDDEN_SIZE so per-layer weights stack cleanly
    HIDDEN_SIZE = 32
    NUM_LAYERS = 2
    BATCH = 2          # TODO(synk): batch decode streams/beams to B>=8 at real sizes

    key = jax.random.PRNGKey(0)
    kp, ki, kh, kc = jax.random.split(key, 4)

    params = init_params(kp, OUTPUT_SIZE, EMBED_SIZE, HIDDEN_SIZE, NUM_LAYERS)
    packed = pack_params(params)
    input_ids = jax.random.randint(ki, (BATCH,), 0, OUTPUT_SIZE, dtype=jnp.int32)
    hidden = jax.random.normal(kh, (NUM_LAYERS, BATCH, HIDDEN_SIZE), jnp.float32)
    cell = jax.random.normal(kc, (NUM_LAYERS, BATCH, HIDDEN_SIZE), jnp.float32)

    # Reference first (hidden/cell are donated to the kernel call below).
    pred_r, h_r, c_r = decoder_forward_ref(params, input_ids, hidden, cell)

    pred, h_new, c_new = jax.block_until_ready(
        decoder_forward(packed, input_ids, hidden, cell))

    assert pred.shape == (BATCH, OUTPUT_SIZE)
    assert h_new.shape == (NUM_LAYERS, BATCH, HIDDEN_SIZE)
    assert c_new.shape == (NUM_LAYERS, BATCH, HIDDEN_SIZE)
    # bf16 matmul operands (f32 accumulate) -> tolerance loosened vs. pure-f32 reference.
    assert jnp.allclose(pred, pred_r, atol=2e-2)
    assert jnp.allclose(h_new, h_r, atol=2e-2)
    assert jnp.allclose(c_new, c_r, atol=2e-2)

    print("KERNEL_OK")
</pallas_src>

<mosaic_0001>
module attributes {stable_mosaic.version = 11 : i64} {
  func.func @_decoder_kernel(%arg0: memref<2xi32, #tpu.memory_space<smem>>, %arg1: memref<16x32xf32, #tpu.memory_space<vmem>>, %arg2: memref<2x2x32xf32, #tpu.memory_space<vmem>>, %arg3: memref<2x2x32xf32, #tpu.memory_space<vmem>>, %arg4: memref<2x64x128xbf16, #tpu.memory_space<vmem>>, %arg5: memref<2x1x128xf32, #tpu.memory_space<vmem>>, %arg6: memref<32x128xbf16, #tpu.memory_space<vmem>>, %arg7: memref<1x128xf32, #tpu.memory_space<vmem>>, %arg8: memref<2x128xf32, #tpu.memory_space<vmem>>, %arg9: memref<2x2x32xf32, #tpu.memory_space<vmem>>, %arg10: memref<2x2x32xf32, #tpu.memory_space<vmem>>, %arg11: memref<2x64xbf16, #tpu.memory_space<vmem>>) attributes {dimension_semantics = [], scalar_prefetch = 0 : i64, scratch_operands = 1 : i64, tpu.core_type = #tpu.core_type<tc>} {
    %c0 = arith.constant 0 : index
    %0 = memref.load %arg0[%c0] : memref<2xi32, #tpu.memory_space<smem>>
    %1 = arith.index_cast %0 : i32 to index
    %c0_0 = arith.constant 0 : index
    %2 = vector.load %arg1[%1, %c0_0] : memref<16x32xf32, #tpu.memory_space<vmem>>, vector<1x32xf32>
    %c1 = arith.constant 1 : index
    %3 = memref.load %arg0[%c1] : memref<2xi32, #tpu.memory_space<smem>>
    %4 = arith.index_cast %3 : i32 to index
    %c0_1 = arith.constant 0 : index
    %5 = vector.load %arg1[%4, %c0_1] : memref<16x32xf32, #tpu.memory_space<vmem>>, vector<1x32xf32>
    %6 = tpu.concatenate %2, %5 in 0 : vector<1x32xf32>, vector<1x32xf32> -> vector<2x32xf32>
    %7 = arith.truncf %6 : vector<2x32xf32> to vector<2x32xbf16>
    %c0_2 = arith.constant 0 : index
    %c0_3 = arith.constant 0 : index
    %8 = vector.load %arg11[%c0_2, %c0_3] : memref<2x64xbf16, #tpu.memory_space<vmem>>, vector<2x32xbf16>
    tpu.vector_store %arg11[%c0_2, %c0_3], %7 {strides = array<i32>} : memref<2x64xbf16, #tpu.memory_space<vmem>>, vector<2x32xbf16>,
    %c0_4 = arith.constant 0 : index
    %c0_5 = arith.constant 0 : index
    %c0_6 = arith.constant 0 : index
    %9 = vector.load %arg2[%c0_4, %c0_5, %c0_6] : memref<2x2x32xf32, #tpu.memory_space<vmem>>, vector<1x2x32xf32>
    %10 = vector.shape_cast %9 : vector<1x2x32xf32> to vector<2x32xf32>
    %c0_7 = arith.constant 0 : index
    %c0_8 = arith.constant 0 : index
    %c0_9 = arith.constant 0 : index
    %11 = vector.load %arg3[%c0_7, %c0_8, %c0_9] : memref<2x2x32xf32, #tpu.memory_space<vmem>>, vector<1x2x32xf32>
    %12 = vector.shape_cast %11 : vector<1x2x32xf32> to vector<2x32xf32>
    %13 = arith.truncf %10 : vector<2x32xf32> to vector<2x32xbf16>
    %c0_10 = arith.constant 0 : index
    %c32 = arith.constant 32 : index
    %14 = vector.load %arg11[%c0_10, %c32] : memref<2x64xbf16, #tpu.memory_space<vmem>>, vector<2x32xbf16>
    tpu.vector_store %arg11[%c0_10, %c32], %13 {strides = array<i32>} : memref<2x64xbf16, #tpu.memory_space<vmem>>, vector<2x32xbf16>,
    %c0_11 = arith.constant 0 : index
    %c0_12 = arith.constant 0 : index
    %15 = vector.load %arg11[%c0_11, %c0_12] : memref<2x64xbf16, #tpu.memory_space<vmem>>, vector<2x64xbf16>
    %c0_13 = arith.constant 0 : index
    %c0_14 = arith.constant 0 : index
    %c0_15 = arith.constant 0 : index
    %16 = vector.load %arg4[%c0_13, %c0_14, %c0_15] : memref<2x64x128xbf16, #tpu.memory_space<vmem>>, vector<1x64x128xbf16>
    %17 = vector.shape_cast %16 : vector<1x64x128xbf16> to vector<64x128xbf16>
    %cst = arith.constant dense<0.000000e+00> : vector<2x128xf32>
    %18 = tpu.matmul %15, %17, %cst {dimension_numbers = #tpu.dot_dimension_numbers<[1], [0], [0], [1], [0, 0, 1, 1], [], []>} : vector<2x64xbf16>, vector<64x128xbf16>, vector<2x128xf32> -> vector<2x128xf32>
    %c0_16 = arith.constant 0 : index
    %c0_17 = arith.constant 0 : index
    %c0_18 = arith.constant 0 : index
    %19 = vector.load %arg5[%c0_16, %c0_17, %c0_18] : memref<2x1x128xf32, #tpu.memory_space<vmem>>, vector<1x1x128xf32>
    %20 = vector.shape_cast %19 : vector<1x1x128xf32> to vector<1x128xf32>
    %21 = vector.broadcast %20 : vector<1x128xf32> to vector<2x128xf32>
    %22 = arith.addf %18, %21 : vector<2x128xf32>
    %23 = vector.extract_strided_slice %22 {offsets = [0, 0], sizes = [2, 96], strides = [1, 1]} : vector<2x128xf32> to vector<2x96xf32>
    %24 = arith.negf %23 : vector<2x96xf32>
    %25 = math.exp %24 : vector<2x96xf32>
    %cst_19 = arith.constant 1.000000e+00 : f32
    %26 = vector.broadcast %cst_19 : f32 to vector<2x96xf32>
    %27 = arith.addf %26, %25 : vector<2x96xf32>
    %28 = arith.divf %26, %27 : vector<2x96xf32>
    %29 = vector.extract_strided_slice %22 {offsets = [0, 96], sizes = [2, 32], strides = [1, 1]} : vector<2x128xf32> to vector<2x32xf32>
    %30 = math.tanh %29 : vector<2x32xf32>
    %31 = vector.extract_strided_slice %28 {offsets = [0, 0], sizes = [2, 32], strides = [1, 1]} : vector<2x96xf32> to vector<2x32xf32>
    %32 = vector.extract_strided_slice %28 {offsets = [0, 32], sizes = [2, 32], strides = [1, 1]} : vector<2x96xf32> to vector<2x32xf32>
    %33 = vector.extract_strided_slice %28 {offsets = [0, 64], sizes = [2, 32], strides = [1, 1]} : vector<2x96xf32> to vector<2x32xf32>
    %34 = arith.mulf %32, %12 : vector<2x32xf32>
    %35 = arith.mulf %31, %30 : vector<2x32xf32>
    %36 = arith.addf %34, %35 : vector<2x32xf32>
    %37 = math.tanh %36 : vector<2x32xf32>
    %38 = arith.mulf %33, %37 : vector<2x32xf32>
    %c0_20 = arith.constant 0 : index
    %c0_21 = arith.constant 0 : index
    %c0_22 = arith.constant 0 : index
    %39 = vector.load %arg9[%c0_20, %c0_21, %c0_22] : memref<2x2x32xf32, #tpu.memory_space<vmem>>, vector<1x2x32xf32>
    %40 = vector.shape_cast %39 : vector<1x2x32xf32> to vector<2x32xf32>
    %41 = vector.shape_cast %38 : vector<2x32xf32> to vector<1x2x32xf32>
    tpu.vector_store %arg9[%c0_20, %c0_21, %c0_22], %41 {strides = array<i32>} : memref<2x2x32xf32, #tpu.memory_space<vmem>>, vector<1x2x32xf32>,
    %c0_23 = arith.constant 0 : index
    %c0_24 = arith.constant 0 : index
    %c0_25 = arith.constant 0 : index
    %42 = vector.load %arg10[%c0_23, %c0_24, %c0_25] : memref<2x2x32xf32, #tpu.memory_space<vmem>>, vector<1x2x32xf32>
    %43 = vector.shape_cast %42 : vector<1x2x32xf32> to vector<2x32xf32>
    %44 = vector.shape_cast %36 : vector<2x32xf32> to vector<1x2x32xf32>
    tpu.vector_store %arg10[%c0_23, %c0_24, %c0_25], %44 {strides = array<i32>} : memref<2x2x32xf32, #tpu.memory_space<vmem>>, vector<1x2x32xf32>,
    %45 = arith.truncf %38 : vector<2x32xf32> to vector<2x32xbf16>
    %c0_26 = arith.constant 0 : index
    %c0_27 = arith.constant 0 : index
    %46 = vector.load %arg11[%c0_26, %c0_27] : memref<2x64xbf16, #tpu.memory_space<vmem>>, vector<2x32xbf16>
    tpu.vector_store %arg11[%c0_26, %c0_27], %45 {strides = array<i32>} : memref<2x64xbf16, #tpu.memory_space<vmem>>, vector<2x32xbf16>,
    %c1_28 = arith.constant 1 : index
    %c0_29 = arith.constant 0 : index
    %c0_30 = arith.constant 0 : index
    %47 = vector.load %arg2[%c1_28, %c0_29, %c0_30] : memref<2x2x32xf32, #tpu.memory_space<vmem>>, vector<1x2x32xf32>
    %48 = vector.shape_cast %47 : vector<1x2x32xf32> to vector<2x32xf32>
    %c1_31 = arith.constant 1 : index
    %c0_32 = arith.constant 0 : index
    %c0_33 = arith.constant 0 : index
    %49 = vector.load %arg3[%c1_31, %c0_32, %c0_33] : memref<2x2x32xf32, #tpu.memory_space<vmem>>, vector<1x2x32xf32>
    %50 = vector.shape_cast %49 : vector<1x2x32xf32> to vector<2x32xf32>
    %51 = arith.truncf %48 : vector<2x32xf32> to vector<2x32xbf16>
    %c0_34 = arith.constant 0 : index
    %c32_35 = arith.constant 32 : index
    %52 = vector.load %arg11[%c0_34, %c32_35] : memref<2x64xbf16, #tpu.memory_space<vmem>>, vector<2x32xbf16>
    tpu.vector_store %arg11[%c0_34, %c32_35], %51 {strides = array<i32>} : memref<2x64xbf16, #tpu.memory_space<vmem>>, vector<2x32xbf16>,
    %c0_36 = arith.constant 0 : index
    %c0_37 = arith.constant 0 : index
    %53 = vector.load %arg11[%c0_36, %c0_37] : memref<2x64xbf16, #tpu.memory_space<vmem>>, vector<2x64xbf16>
    %c1_38 = arith.constant 1 : index
    %c0_39 = arith.constant 0 : index
    %c0_40 = arith.constant 0 : index
    %54 = vector.load %arg4[%c1_38, %c0_39, %c0_40] : memref<2x64x128xbf16, #tpu.memory_space<vmem>>, vector<1x64x128xbf16>
    %55 = vector.shape_cast %54 : vector<1x64x128xbf16> to vector<64x128xbf16>
    %cst_41 = arith.constant dense<0.000000e+00> : vector<2x128xf32>
    %56 = tpu.matmul %53, %55, %cst_41 {dimension_numbers = #tpu.dot_dimension_numbers<[1], [0], [0], [1], [0, 0, 1, 1], [], []>} : vector<2x64xbf16>, vector<64x128xbf16>, vector<2x128xf32> -> vector<2x128xf32>
    %c1_42 = arith.constant 1 : index
    %c0_43 = arith.constant 0 : index
    %c0_44 = arith.constant 0 : index
    %57 = vector.load %arg5[%c1_42, %c0_43, %c0_44] : memref<2x1x128xf32, #tpu.memory_space<vmem>>, vector<1x1x128xf32>
    %58 = vector.shape_cast %57 : vector<1x1x128xf32> to vector<1x128xf32>
    %59 = vector.broadcast %58 : vector<1x128xf32> to vector<2x128xf32>
    %60 = arith.addf %56, %59 : vector<2x128xf32>
    %61 = vector.extract_strided_slice %60 {offsets = [0, 0], sizes = [2, 96], strides = [1, 1]} : vector<2x128xf32> to vector<2x96xf32>
    %62 = arith.negf %61 : vector<2x96xf32>
    %63 = math.exp %62 : vector<2x96xf32>
    %cst_45 = arith.constant 1.000000e+00 : f32
    %64 = vector.broadcast %cst_45 : f32 to vector<2x96xf32>
    %65 = arith.addf %64, %63 : vector<2x96xf32>
    %66 = arith.divf %64, %65 : vector<2x96xf32>
    %67 = vector.extract_strided_slice %60 {offsets = [0, 96], sizes = [2, 32], strides = [1, 1]} : vector<2x128xf32> to vector<2x32xf32>
    %68 = math.tanh %67 : vector<2x32xf32>
    %69 = vector.extract_strided_slice %66 {offsets = [0, 0], sizes = [2, 32], strides = [1, 1]} : vector<2x96xf32> to vector<2x32xf32>
    %70 = vector.extract_strided_slice %66 {offsets = [0, 32], sizes = [2, 32], strides = [1, 1]} : vector<2x96xf32> to vector<2x32xf32>
    %71 = vector.extract_strided_slice %66 {offsets = [0, 64], sizes = [2, 32], strides = [1, 1]} : vector<2x96xf32> to vector<2x32xf32>
    %72 = arith.mulf %70, %50 : vector<2x32xf32>
    %73 = arith.mulf %69, %68 : vector<2x32xf32>
    %74 = arith.addf %72, %73 : vector<2x32xf32>
    %75 = math.tanh %74 : vector<2x32xf32>
    %76 = arith.mulf %71, %75 : vector<2x32xf32>
    %c1_46 = arith.constant 1 : index
    %c0_47 = arith.constant 0 : index
    %c0_48 = arith.constant 0 : index
    %77 = vector.load %arg9[%c1_46, %c0_47, %c0_48] : memref<2x2x32xf32, #tpu.memory_space<vmem>>, vector<1x2x32xf32>
    %78 = vector.shape_cast %77 : vector<1x2x32xf32> to vector<2x32xf32>
    %79 = vector.shape_cast %76 : vector<2x32xf32> to vector<1x2x32xf32>
    tpu.vector_store %arg9[%c1_46, %c0_47, %c0_48], %79 {strides = array<i32>} : memref<2x2x32xf32, #tpu.memory_space<vmem>>, vector<1x2x32xf32>,
    %c1_49 = arith.constant 1 : index
    %c0_50 = arith.constant 0 : index
    %c0_51 = arith.constant 0 : index
    %80 = vector.load %arg10[%c1_49, %c0_50, %c0_51] : memref<2x2x32xf32, #tpu.memory_space<vmem>>, vector<1x2x32xf32>
    %81 = vector.shape_cast %80 : vector<1x2x32xf32> to vector<2x32xf32>
    %82 = vector.shape_cast %74 : vector<2x32xf32> to vector<1x2x32xf32>
    tpu.vector_store %arg10[%c1_49, %c0_50, %c0_51], %82 {strides = array<i32>} : memref<2x2x32xf32, #tpu.memory_space<vmem>>, vector<1x2x32xf32>,
    %83 = arith.truncf %76 : vector<2x32xf32> to vector<2x32xbf16>
    %c0_52 = arith.constant 0 : index
    %c0_53 = arith.constant 0 : index
    %84 = vector.load %arg6[%c0_52, %c0_53] : memref<32x128xbf16, #tpu.memory_space<vmem>>, vector<32x128xbf16>
    %cst_54 = arith.constant dense<0.000000e+00> : vector<2x128xf32>
    %85 = tpu.matmul %83, %84, %cst_54 {dimension_numbers = #tpu.dot_dimension_numbers<[1], [0], [0], [1], [0, 0, 1, 1], [], []>} : vector<2x32xbf16>, vector<32x128xbf16>, vector<2x128xf32> -> vector<2x128xf32>
    %c0_55 = arith.constant 0 : index
    %c0_56 = arith.constant 0 : index
    %86 = vector.load %arg7[%c0_55, %c0_56] : memref<1x128xf32, #tpu.memory_space<vmem>>, vector<1x128xf32>
    %87 = vector.broadcast %86 : vector<1x128xf32> to vector<2x128xf32>
    %88 = arith.addf %85, %87 : vector<2x128xf32>
    %c0_57 = arith.constant 0 : index
    %c0_58 = arith.constant 0 : index
    %89 = vector.load %arg8[%c0_57, %c0_58] : memref<2x128xf32, #tpu.memory_space<vmem>>, vector<2x128xf32>
    tpu.vector_store %arg8[%c0_57, %c0_58], %88 {strides = array<i32>} : memref<2x128xf32, #tpu.memory_space<vmem>>, vector<2x128xf32>,
    return
  }
}

</mosaic_0001>

<llo_original>
// kernel: decoder_forward.1
$region0: #{decoder_forward.1}
  #allocation0 [shape = 'u32[]', space=smem, size = 0x4, offset = 0x4, fixed_abs, tag = 'smem constant byte address 0x4 - core index']
  #allocation1 [shape = 'u32[144,128]{1,0:T(1,128)}', space=vmem, size = 0x12000, scoped, tag = 'internal scratch']
  #allocation2 [shape = 'bf16[2,64]{1,0:T(2,128)(2,1)}', space=vmem, size = 0x200, scoped, tag = 'scratch operand']
  %s0 = inlined_call_operand.vmem [shape: s32[2], index: 0, kind: input, shape index: {}]
  %s1 = inlined_call_operand.hbm [shape: f32[16,32], index: 1, kind: input, shape index: {}]
  %s2 = inlined_call_operand.vmem [shape: f32[2,2,32], index: 2, kind: input, shape index: {}, may-alias: {2,9}]
  %s3 = inlined_call_operand.vmem [shape: f32[2,2,32], index: 3, kind: input, shape index: {}, may-alias: {3,10}]
  %s4 = inlined_call_operand.hbm [shape: bf16[2,64,128], index: 4, kind: input, shape index: {}]
  %s5 = inlined_call_operand.hbm [shape: f32[2,1,128], index: 5, kind: input, shape index: {}]
  %s6 = inlined_call_operand.hbm [shape: bf16[32,128], index: 6, kind: input, shape index: {}]
  %s7 = inlined_call_operand.hbm [shape: f32[1,128], index: 7, kind: input, shape index: {}]
  %s8 = inlined_call_operand.hbm [shape: f32[2,128], index: 8, kind: output, shape index: {0}]
  %s9 = inlined_call_operand.vmem [shape: f32[2,2,32], index: 9, kind: output, shape index: {1}, may-alias: {2,9}]
  %s10 = inlined_call_operand.vmem [shape: f32[2,2,32], index: 10, kind: output, shape index: {2}, may-alias: {3,10}]
  %11 = xla_tuple %s8, %s9, %s10
  %s12 = sld [smem:[#allocation0]]
  $region82: #{decoder_forward.1} parent=0
    _
  %s14 = ssub.s32 1, %s12
  %s15 = scalar_select 0, %s14, %s12
  $region1: #{decoder_forward.1} parent=0
    #allocation3 [shape = 'u8[512]{0}', space=smem, size = 0x200, scoped, tag = 'input window, operand 0, single buffered']
    #allocation4 [shape = 's32[1]{0}', space=sflag, size = 0x4, scoped, tag = 'scoped memory for decoder_forward.1']
    #allocation5 [shape = 's32[1]{0}', space=sflag, size = 0x4, scoped, tag = 'scoped memory for decoder_forward.1']
    #allocation6 [shape = 's32[1]{0}', space=sflag, size = 0x4, scoped, tag = 'scoped memory for decoder_forward.1']
    #allocation7 [shape = 'u8[8192]{0}', space=vmem, size = 0x2000, scoped, tag = 'input window, operand 1, single buffered']
    #allocation8 [shape = 'u8[32768]{0}', space=vmem, size = 0x8000, scoped, tag = 'input window, operand 4, single buffered']
    #allocation9 [shape = 's32[1]{0}', space=sflag, size = 0x4, scoped, tag = 'scoped memory for decoder_forward.1']
    #allocation10 [shape = 'u8[1024]{0}', space=vmem, size = 0x400, scoped, tag = 'input window, operand 5, single buffered']
    #allocation11 [shape = 'u8[8192]{0}', space=vmem, size = 0x2000, scoped, tag = 'input window, operand 6, single buffered']
    #allocation12 [shape = 's32[1]{0}', space=sflag, size = 0x4, scoped, tag = 'scoped memory for decoder_forward.1']
    #allocation13 [shape = 'u8[512]{0}', space=vmem, size = 0x400, scoped, tag = 'input window, operand 7, single buffered']
    #allocation14 [shape = 'u8[1024]{0}', space=vmem, size = 0x400, scoped, tag = 'output window, operand 0, single buffered']
    %16 = vsyncpa [#allocation6], 0
    %17 = vsyncpa [#allocation4], 0
    %18 = vsyncpa [#allocation9], 0
    %19 = vsyncpa [#allocation12], 0
    %20 = vsyncpa [#allocation5], 0
    // Predicated region
    $region2: #{decoder_forward.1} parent=1 // pred_check
      _
    $region3: #{decoder_forward.1} parent=1 // pred_check_branch
      %22 = sbr.rel (0) target = $region5
    $region4: #{decoder_forward.1} parent=1 // pred_region
      %s24 = ssub.s32 16, 16
      %25 = vsyncadd [#allocation6], %s24
      %s27 = sshll.u32 %s0, 4
      %s28 = int_to_ptr.vmem [resolvable:$true] %s27
      %30 = dma.vmem_to_smem %s28, 16, [#allocation3], [#allocation6]
    $region5: #{decoder_forward.1} parent=1 // pred_fallthru
      _
    // Predicated region
    $region6: #{decoder_forward.1} parent=1 // pred_check
      _
    $region7: #{decoder_forward.1} parent=1 // pred_check_branch
      %32 = sbr.rel (0) target = $region9
    $region8: #{decoder_forward.1} parent=1 // pred_region
      %s34 = ssub.s32 256, 256
      %35 = vsyncadd [#allocation4], %s34
      %s36 = sshll.u32 [#allocation7], 4
      %s37 = int_to_ptr.vmem [resolvable:$true] %s36
      %42 = dma.hbm_to_vmem [thread:$0]  %s1, 256, %s37, [#allocation4], 128, 128, 8
    $region9: #{decoder_forward.1} parent=1 // pred_fallthru
      _
    // Predicated region
    $region10: #{decoder_forward.1} parent=1 // pred_check
      _
    $region11: #{decoder_forward.1} parent=1 // pred_check_branch
      %44 = sbr.rel (0) target = $region13
    $region12: #{decoder_forward.1} parent=1 // pred_region
      _
    $region13: #{decoder_forward.1} parent=1 // pred_fallthru
      _
    // Predicated region
    $region14: #{decoder_forward.1} parent=1 // pred_check
      _
    $region15: #{decoder_forward.1} parent=1 // pred_check_branch
      %46 = sbr.rel (0) target = $region17
    $region16: #{decoder_forward.1} parent=1 // pred_region
      _
    $region17: #{decoder_forward.1} parent=1 // pred_fallthru
      _
    // Predicated region
    $region18: #{decoder_forward.1} parent=1 // pred_check
      _
    $region19: #{decoder_forward.1} parent=1 // pred_check_branch
      %48 = sbr.rel (0) target = $region21
    $region20: #{decoder_forward.1} parent=1 // pred_region
      %s50 = ssub.s32 1024, 1024
      %51 = vsyncadd [#allocation9], %s50
      %s52 = sshll.u32 [#allocation8], 4
      %s53 = int_to_ptr.vmem [resolvable:$true] %s52
      %58 = dma.hbm_to_vmem [thread:$0]  %s4, 1024, %s53, [#allocation9], 64, 64, 4
    $region21: #{decoder_forward.1} parent=1 // pred_fallthru
      _
    // Predicated region
    $region22: #{decoder_forward.1} parent=1 // pred_check
      _
    $region23: #{decoder_forward.1} parent=1 // pred_check_branch
      %60 = sbr.rel (0) target = $region25
    $region24: #{decoder_forward.1} parent=1 // pred_region
      %s62 = ssub.s32 32, 32
      %63 = vsyncadd [#allocation9], %s62
      %s64 = sshll.u32 [#allocation10], 4
      %s65 = int_to_ptr.vmem [resolvable:$true] %s64
      %70 = dma.hbm_to_vmem [thread:$0]  %s5, 32, %s65, [#allocation9], 16, 16, 1
    $region25: #{decoder_forward.1} parent=1 // pred_fallthru
      _
    // Predicated region
    $region26: #{decoder_forward.1} parent=1 // pred_check
      _
    $region27: #{decoder_forward.1} parent=1 // pred_check_branch
      %72 = sbr.rel (0) target = $region29
    $region28: #{decoder_forward.1} parent=1 // pred_region
      %s74 = ssub.s32 256, 256
      %75 = vsyncadd [#allocation12], %s74
      %s76 = sshll.u32 [#allocation11], 4
      %s77 = int_to_ptr.vmem [resolvable:$true] %s76
      %82 = dma.hbm_to_vmem [thread:$0]  %s6, 256, %s77, [#allocation12], 64, 64, 4
    $region29: #{decoder_forward.1} parent=1 // pred_fallthru
      _
    // Predicated region
    $region30: #{decoder_forward.1} parent=1 // pred_check
      _
    $region31: #{decoder_forward.1} parent=1 // pred_check_branch
      %84 = sbr.rel (0) target = $region33
    $region32: #{decoder_forward.1} parent=1 // pred_region
      %s86 = ssub.s32 16, 16
      %87 = vsyncadd [#allocation12], %s86
      %s89 = sshll.u32 [#allocation13], 4
      %s90 = int_to_ptr.vmem [resolvable:$true] %s89
      %92 = dma.hbm_to_vmem [thread:$0]  %s7, 16, %s90, [#allocation12]
    $region33: #{decoder_forward.1} parent=1 // pred_fallthru
      _
    // Predicated region
    $region34: #{decoder_forward.1} parent=1 // pred_check
      _
    $region35: #{decoder_forward.1} parent=1 // pred_check_branch
      %94 = sbr.rel (0) target = $region37
    $region36: #{decoder_forward.1} parent=1 // pred_region
      %95 = dma.done [#allocation6], 16
    $region37: #{decoder_forward.1} parent=1 // pred_fallthru
      _
    // Predicated region
    $region38: #{decoder_forward.1} parent=1 // pred_check
      _
    $region39: #{decoder_forward.1} parent=1 // pred_check_branch
      %97 = sbr.rel (0) target = $region41
    $region40: #{decoder_forward.1} parent=1 // pred_region
      %98 = dma.done [#allocation4], 256
    $region41: #{decoder_forward.1} parent=1 // pred_fallthru
      _
    // Predicated region
    $region42: #{decoder_forward.1} parent=1 // pred_check
      _
    $region43: #{decoder_forward.1} parent=1 // pred_check_branch
      %100 = sbr.rel (0) target = $region45
    $region44: #{decoder_forward.1} parent=1 // pred_region
      %101 = dma.done [#allocation9], 1024
    $region45: #{decoder_forward.1} parent=1 // pred_fallthru
      _
    // Predicated region
    $region46: #{decoder_forward.1} parent=1 // pred_check
      _
    $region47: #{decoder_forward.1} parent=1 // pred_check_branch
      %103 = sbr.rel (0) target = $region49
    $region48: #{decoder_forward.1} parent=1 // pred_region
      %104 = dma.done [#allocation9], 32
    $region49: #{decoder_forward.1} parent=1 // pred_fallthru
      _
    // Predicated region
    $region50: #{decoder_forward.1} parent=1 // pred_check
      _
    $region51: #{decoder_forward.1} parent=1 // pred_check_branch
      %106 = sbr.rel (0) target = $region53
    $region52: #{decoder_forward.1} parent=1 // pred_region
      %107 = dma.done [#allocation12], 256
    $region53: #{decoder_forward.1} parent=1 // pred_fallthru
      _
    // Predicated region
    $region54: #{decoder_forward.1} parent=1 // pred_check
      _
    $region55: #{decoder_forward.1} parent=1 // pred_check_branch
      %109 = sbr.rel (0) target = $region57
    $region56: #{decoder_forward.1} parent=1 // pred_region
      %110 = dma.done [#allocation12], 16
    $region57: #{decoder_forward.1} parent=1 // pred_fallthru
      _
    %111 = sfence
    %s113 = sld [smem:[#allocation3]]
    %s114 = scalar_lea.vmem [#allocation7], %s113
    %v115 = vld [vmem:[%s114] sm:$0x1]
    %s116 = sld [smem:[#allocation3 + $0x1]]
    %s117 = scalar_lea.vmem [#allocation7], %s116
    %v118 = vld [vmem:[%s117] sm:$0x1]
    %v120 = vrot.slane %v118, 7
    %vm122 = vcmask 1040384
    %v123 = vsel %vm122, %v115, %v120
    %v124 = vpack.c.bf16 %v123, %v123
    %vm125 = vcmask 253952
    %126 = vst.msk [vmem:[#allocation2] sm:$0x1] %vm125, %v124
    %v127 = vld [vmem:[%s2] sm:$0x3]
    %v128 = vld [vmem:[%s3] sm:$0x3]
    %v129 = vpack.c.bf16 %v127, %v127
    %v132 = vunpack.c.l.s4 1966171168
    %v133 = vunpack.c.0.s8 %v132
    %v134 = vlaneseq
    %v135 = vshrl.u32 %v134, 7
    %v136 = vsub.s32 %v133, %v135
    %v137 = vrot.slane %v129, %v136
    %v139 = vunpack.c.l.s4 1966171168
    %v140 = vunpack.c.0.s8 %v139
    %v141 = vlaneseq
    %v142 = vshrl.u32 %v141, 7
    %v143 = vsub.s32 %v140, %v142
    %v144 = vrot.slane %v137, %v143
    %145 = vrot.lane.b32.xlu0 %v144, 32
    %v146 = vpop.permute.xlu0 %145
    %vm148 = vcmask 516352
    %149 = vst.msk [vmem:[#allocation2] sm:$0x1] %vm148, %v146
    %v150 = vld [vmem:[#allocation2] sm:$0x1]
    %v151 = vld [vmem:[#allocation8] sm:$0xf]
    %v152 = vld [vmem:[#allocation8 + $0x4] sm:$0xf]
    %v153 = vld [vmem:[#allocation8 + $0x8] sm:$0xf]
    %v154 = vld [vmem:[#allocation8 + $0xc] sm:$0xf]
    %v155 = vld [vmem:[#allocation8 + $0x10] sm:$0xf]
    %v156 = vld [vmem:[#allocation8 + $0x14] sm:$0xf]
    %v157 = vld [vmem:[#allocation8 + $0x18] sm:$0xf]
    %v158 = vld [vmem:[#allocation8 + $0x1c] sm:$0xf]
    %v159 = vld [vmem:[#allocation10] sm:$0x1]
    %v161 = vlaneseq
    %v162 = vshrl.u32 %v161, 7
    %v163 = vsub.s32 0, %v162
    %v164 = vrot.slane %v159, %v163
    %v174 = vunpack.c.l.b16 %v151
    %v175 = vunpack.c.l.b16 %v152
    %v176 = vunpack.c.l.b16 %v153
    %v177 = vunpack.c.l.b16 %v154
    %v178 = vunpack.c.l.b16 %v155
    %v179 = vunpack.c.l.b16 %v156
    %v180 = vunpack.c.l.b16 %v157
    %v181 = vunpack.c.l.b16 %v158
    %v182 = vpack.c.b16 %v175, %v174
    %v183 = vpack.c.b16 %v177, %v176
    %v184 = vpack.c.b16 %v179, %v178
    %v185 = vpack.c.b16 %v181, %v180
    %vm190 = vcmask 523264
    %v192 = vsel %vm190, %v150, 0
    %194 = vmatprep.subr.bf16.mxu0 0
    %195 = vmatpush1.bf16.msra.mxu0 0
    %196 = vmatprep.subr.bf16.mxu0 0
    %197 = vmatpush1.bf16.msra.mxu0 0
    %198 = vmatprep.subr.bf16.mxu0 0
    %199 = vmatpush1.bf16.msra.mxu0 0
    %200 = vmatprep.subr.bf16.mxu0 0
    %201 = vmatpush1.bf16.msra.mxu0 0
    %202 = vmatprep.subr.bf16.mxu0 0
    %203 = vmatpush1.bf16.msra.mxu0 %v185
    %204 = vmatprep.subr.bf16.mxu0 0
    %205 = vmatpush1.bf16.msra.mxu0 %v184
    %206 = vmatprep.subr.bf16.mxu0 0
    %207 = vmatpush1.bf16.msra.mxu0 %v183
    %208 = vmatprep.subr.bf16.mxu0 0
    %209 = vmatpush1.bf16.msra.mxu0 %v182
    %210 = vmatprep.subr.bf16.mxu0 0
    %211 = vmatpush2.bf16.msra.mxu0 0
    %212 = vmatprep.subr.bf16.mxu0 0
    %213 = vmatpush2.bf16.msra.mxu0 0
    %214 = vmatprep.subr.bf16.mxu0 0
    %215 = vmatpush2.bf16.msra.mxu0 0
    %216 = vmatprep.subr.bf16.mxu0 0
    %217 = vmatpush2.bf16.msra.mxu0 0
    %218 = vmatprep.subr.bf16.mxu0 0
    %219 = vmatpush2.bf16.msra.mxu0 0
    %220 = vmatprep.subr.bf16.mxu0 0
    %221 = vmatpush2.bf16.msra.mxu0 0
    %222 = vmatprep.subr.bf16.mxu0 0
    %223 = vmatpush2.bf16.msra.mxu0 0
    %224 = vmatprep.subr.bf16.mxu0 0
    %225 = vmatpush2.bf16.msra.mxu0 0
    %226 = vmatprep.mubr.bf16.mxu0 0
    %227 = vmatmul.mubr.bf16.gmra.mxu0 %v192
    %v228 = vpop.f32.mrf.mxu0
    %v229 = vadd.f32 %v164, %v228
    %v230 = vpop.f32.mrf.mxu0
    %v231 = vpop.f32.mrf.mxu0
    %v232 = vpop.f32.mrf.mxu0
    %233 = vdwg.mxu0
    %v234 = vxor.u32 %v229, 2147483648
    %v235 = vmul.f32 %v234, 1.442695
    %v236 = vpow.pop %v235
    %v237 = vadd.f32 %v236, 1.0
    %v238 = vrcp.pop %v237
    %v239 = vmul.f32 1.0, %v238
    %v240 = vtanh.pop %v229
    %242 = vrot.lane.b32.xlu0 %v128, 32
    %v243 = vpop.permute.xlu0 %242
    %v245 = vmul.f32 %v239, %v243
    %247 = vrot.lane.b32.xlu0 %v240, 32
    %v248 = vpop.permute.xlu0 %247
    %v250 = vmul.f32 %v239, %v248
    %252 = vrot.lane.b32.xlu0 %v250, 32
    %v253 = vpop.permute.xlu0 %252
    %v255 = vadd.f32 %v245, %v253
    %v256 = vtanh.pop %v255
    %258 = vrot.lane.b32.xlu0 %v256, 32
    %v259 = vpop.permute.xlu0 %258
    %v261 = vmul.f32 %v239, %v259
    %263 = vrot.lane.b32.xlu0 %v261, 64
    %v264 = vpop.permute.xlu0 %263
    %vm266 = vcmask 254976
    %267 = vst.msk [vmem:[%s9] sm:$0x3] %vm266, %v264
    %269 = vrot.lane.b32.xlu0 %v255, 96
    %v270 = vpop.permute.xlu0 %269
    %272 = vst.msk [vmem:[%s10] sm:$0x3] %vm266, %v270
    %v273 = vpack.c.bf16 %v261, %v261
    %v276 = vunpack.c.l.s4 1966171168
    %v277 = vunpack.c.0.s8 %v276
    %v278 = vlaneseq
    %v279 = vshrl.u32 %v278, 7
    %v280 = vsub.s32 %v277, %v279
    %v281 = vrot.slane %v273, %v280
    %v283 = vunpack.c.l.s4 1966171168
    %v284 = vunpack.c.0.s8 %v283
    %v285 = vlaneseq
    %v286 = vshrl.u32 %v285, 7
    %v287 = vsub.s32 %v284, %v286
    %v288 = vrot.slane %v281, %v287
    %289 = vrot.lane.b32.xlu0 %v288, 64
    %v290 = vpop.permute.xlu0 %289
    %292 = vst.msk [vmem:[#allocation2] sm:$0x1] %vm125, %v290
    %s293 = scalar_lea.vmem %s2, 2
    %v294 = vld [vmem:[%s293] sm:$0x3]
    %s295 = scalar_lea.vmem %s3, 2
    %v296 = vld [vmem:[%s295] sm:$0x3]
    %v297 = vpack.c.bf16 %v294, %v294
    %v300 = vunpack.c.l.s4 1966171168
    %v301 = vunpack.c.0.s8 %v300
    %v302 = vlaneseq
    %v303 = vshrl.u32 %v302, 7
    %v304 = vsub.s32 %v301, %v303
    %v305 = vrot.slane %v297, %v304
    %v307 = vunpack.c.l.s4 1966171168
    %v308 = vunpack.c.0.s8 %v307
    %v309 = vlaneseq
    %v310 = vshrl.u32 %v309, 7
    %v311 = vsub.s32 %v308, %v310
    %v312 = vrot.slane %v305, %v311
    %313 = vrot.lane.b32.xlu0 %v312, 32
    %v314 = vpop.permute.xlu0 %313
    %316 = vst.msk [vmem:[#allocation2] sm:$0x1] %vm148, %v314
    %v317 = vld [vmem:[#allocation2] sm:$0x1]
    %s318 = scalar_lea.vmem [#allocation8], 32
    %v319 = vld [vmem:[%s318] sm:$0xf]
    %v320 = vld [vmem:[%s318 + $0x4] sm:$0xf]
    %v321 = vld [vmem:[%s318 + $0x8] sm:$0xf]
    %v322 = vld [vmem:[%s318 + $0xc] sm:$0xf]
    %v323 = vld [vmem:[%s318 + $0x10] sm:$0xf]
    %v324 = vld [vmem:[%s318 + $0x14] sm:$0xf]
    %v325 = vld [vmem:[%s318 + $0x18] sm:$0xf]
    %v326 = vld [vmem:[%s318 + $0x1c] sm:$0xf]
    %s327 = scalar_lea.vmem [#allocation10], 1
    %v328 = vld [vmem:[%s327] sm:$0x1]
    %v330 = vlaneseq
    %v331 = vshrl.u32 %v330, 7
    %v332 = vsub.s32 0, %v331
    %v333 = vrot.slane %v328, %v332
    %v343 = vunpack.c.l.b16 %v319
    %v344 = vunpack.c.l.b16 %v320
    %v345 = vunpack.c.l.b16 %v321
    %v346 = vunpack.c.l.b16 %v322
    %v347 = vunpack.c.l.b16 %v323
    %v348 = vunpack.c.l.b16 %v324
    %v349 = vunpack.c.l.b16 %v325
    %v350 = vunpack.c.l.b16 %v326
    %v351 = vpack.c.b16 %v344, %v343
    %v352 = vpack.c.b16 %v346, %v345
    %v353 = vpack.c.b16 %v348, %v347
    %v354 = vpack.c.b16 %v350, %v349
    %v360 = vsel %vm190, %v317, 0
    %362 = vmatprep.subr.bf16.mxu0 0
    %363 = vmatpush1.bf16.msra.mxu0 0
    %364 = vmatprep.subr.bf16.mxu0 0
    %365 = vmatpush1.bf16.msra.mxu0 0
    %366 = vmatprep.subr.bf16.mxu0 0
    %367 = vmatpush1.bf16.msra.mxu0 0
    %368 = vmatprep.subr.bf16.mxu0 0
    %369 = vmatpush1.bf16.msra.mxu0 0
    %370 = vmatprep.subr.bf16.mxu0 0
    %371 = vmatpush1.bf16.msra.mxu0 %v354
    %372 = vmatprep.subr.bf16.mxu0 0
    %373 = vmatpush1.bf16.msra.mxu0 %v353
    %374 = vmatprep.subr.bf16.mxu0 0
    %375 = vmatpush1.bf16.msra.mxu0 %v352
    %376 = vmatprep.subr.bf16.mxu0 0
    %377 = vmatpush1.bf16.msra.mxu0 %v351
    %378 = vmatprep.subr.bf16.mxu0 0
    %379 = vmatpush2.bf16.msra.mxu0 0
    %380 = vmatprep.subr.bf16.mxu0 0
    %381 = vmatpush2.bf16.msra.mxu0 0
    %382 = vmatprep.subr.bf16.mxu0 0
    %383 = vmatpush2.bf16.msra.mxu0 0
    %384 = vmatprep.subr.bf16.mxu0 0
    %385 = vmatpush2.bf16.msra.mxu0 0
    %386 = vmatprep.subr.bf16.mxu0 0
    %387 = vmatpush2.bf16.msra.mxu0 0
    %388 = vmatprep.subr.bf16.mxu0 0
    %389 = vmatpush2.bf16.msra.mxu0 0
    %390 = vmatprep.subr.bf16.mxu0 0
    %391 = vmatpush2.bf16.msra.mxu0 0
    %392 = vmatprep.subr.bf16.mxu0 0
    %393 = vmatpush2.bf16.msra.mxu0 0
    %394 = vmatprep.mubr.bf16.mxu0 0
    %395 = vmatmul.mubr.bf16.gmra.mxu0 %v360
    %v396 = vpop.f32.mrf.mxu0
    %v397 = vadd.f32 %v333, %v396
    %v398 = vpop.f32.mrf.mxu0
    %v399 = vpop.f32.mrf.mxu0
    %v400 = vpop.f32.mrf.mxu0
    %401 = vdwg.mxu0
    %v402 = vxor.u32 %v397, 2147483648
    %v403 = vmul.f32 %v402, 1.442695
    %v404 = vpow.pop %v403
    %v405 = vadd.f32 %v404, 1.0
    %v406 = vrcp.pop %v405
    %v407 = vmul.f32 1.0, %v406
    %v408 = vtanh.pop %v397
    %410 = vrot.lane.b32.xlu0 %v296, 32
    %v411 = vpop.permute.xlu0 %410
    %v413 = vmul.f32 %v407, %v411
    %415 = vrot.lane.b32.xlu0 %v408, 32
    %v416 = vpop.permute.xlu0 %415
    %v418 = vmul.f32 %v407, %v416
    %420 = vrot.lane.b32.xlu0 %v418, 32
    %v421 = vpop.permute.xlu0 %420
    %v423 = vadd.f32 %v413, %v421
    %v424 = vtanh.pop %v423
    %426 = vrot.lane.b32.xlu0 %v424, 32
    %v427 = vpop.permute.xlu0 %426
    %v429 = vmul.f32 %v407, %v427
    %431 = vrot.lane.b32.xlu0 %v429, 64
    %v432 = vpop.permute.xlu0 %431
    %s434 = scalar_lea.vmem %s9, 2
    %435 = vst.msk [vmem:[%s434] sm:$0x3] %vm266, %v432
    %437 = vrot.lane.b32.xlu0 %v423, 96
    %v438 = vpop.permute.xlu0 %437
    %s440 = scalar_lea.vmem %s10, 2
    %441 = vst.msk [vmem:[%s440] sm:$0x3] %vm266, %v438
    %v442 = vpack.c.bf16 %v429, %v429
    %v443 = vld [vmem:[#allocation11] sm:$0xf]
    %v444 = vld [vmem:[#allocation11 + $0x4] sm:$0xf]
    %v445 = vld [vmem:[#allocation11 + $0x8] sm:$0xf]
    %v446 = vld [vmem:[#allocation11 + $0xc] sm:$0xf]
    %v447 = vld [vmem:[#allocation13] sm:$0x1]
    %v449 = vlaneseq
    %v450 = vshrl.u32 %v449, 7
    %v451 = vsub.s32 0, %v450
    %v452 = vrot.slane %v447, %v451
    %455 = vrot.lane.b32.xlu0 %v442, 64
    %v456 = vpop.permute.xlu0 %455
    %v461 = vunpack.c.l.b16 %v443
    %v462 = vunpack.c.l.b16 %v444
    %v463 = vunpack.c.l.b16 %v445
    %v464 = vunpack.c.l.b16 %v446
    %v465 = vpack.c.b16 %v462, %v461
    %v466 = vpack.c.b16 %v464, %v463
    %vm469 = vcmask 261120
    %v471 = vsel %vm469, %v456, 0
    %473 = vmatprep.subr.bf16.mxu0 0
    %474 = vmatpush1.bf16.msra.mxu0 0
    %475 = vmatprep.subr.bf16.mxu0 0
    %476 = vmatpush1.bf16.msra.mxu0 0
    %477 = vmatprep.subr.bf16.mxu0 0
    %478 = vmatpush1.bf16.msra.mxu0 0
    %479 = vmatprep.subr.bf16.mxu0 0
    %480 = vmatpush1.bf16.msra.mxu0 0
    %481 = vmatprep.subr.bf16.mxu0 0
    %482 = vmatpush1.bf16.msra.mxu0 0
    %483 = vmatprep.subr.bf16.mxu0 0
    %484 = vmatpush1.bf16.msra.mxu0 0
    %485 = vmatprep.subr.bf16.mxu0 0
    %486 = vmatpush1.bf16.msra.mxu0 %v466
    %487 = vmatprep.subr.bf16.mxu0 0
    %488 = vmatpush1.bf16.msra.mxu0 %v465
    %489 = vmatprep.subr.bf16.mxu0 0
    %490 = vmatpush2.bf16.msra.mxu0 0
    %491 = vmatprep.subr.bf16.mxu0 0
    %492 = vmatpush2.bf16.msra.mxu0 0
    %493 = vmatprep.subr.bf16.mxu0 0
    %494 = vmatpush2.bf16.msra.mxu0 0
    %495 = vmatprep.subr.bf16.mxu0 0
    %496 = vmatpush2.bf16.msra.mxu0 0
    %497 = vmatprep.subr.bf16.mxu0 0
    %498 = vmatpush2.bf16.msra.mxu0 0
    %499 = vmatprep.subr.bf16.mxu0 0
    %500 = vmatpush2.bf16.msra.mxu0 0
    %501 = vmatprep.subr.bf16.mxu0 0
    %502 = vmatpush2.bf16.msra.mxu0 0
    %503 = vmatprep.subr.bf16.mxu0 0
    %504 = vmatpush2.bf16.msra.mxu0 0
    %505 = vmatprep.mubr.bf16.mxu0 0
    %506 = vmatmul.mubr.bf16.gmra.mxu0 %v471
    %v507 = vpop.f32.mrf.mxu0
    %v508 = vadd.f32 %v452, %v507
    %v509 = vpop.f32.mrf.mxu0
    %v510 = vpop.f32.mrf.mxu0
    %v511 = vpop.f32.mrf.mxu0
    %512 = vdwg.mxu0
    %513 = vst [vmem:[#allocation14] sm:$0x3] %v508
    // Predicated region
    $region58: #{decoder_forward.1} parent=1 // pred_check
      _
    $region59: #{decoder_forward.1} parent=1 // pred_check_branch
      %515 = sbr.rel (0) target = $region61
    $region60: #{decoder_forward.1} parent=1 // pred_region
      %s517 = ssub.s32 32, 32
      %518 = vsyncadd [#allocation5], %s517
      %s520 = sshll.u32 [#allocation14], 4
      %s521 = int_to_ptr.vmem [resolvable:$true] %s520
      %523 = dma.vmem_to_hbm [thread:$0]  %s521, 32, %s8, [#allocation5]
    $region61: #{decoder_forward.1} parent=1 // pred_fallthru
      _
    // Predicated region
    $region62: #{decoder_forward.1} parent=1 // pred_check
      _
    $region63: #{decoder_forward.1} parent=1 // pred_check_branch
      %525 = sbr.rel (0) target = $region65
    $region64: #{decoder_forward.1} parent=1 // pred_region
      _
    $region65: #{decoder_forward.1} parent=1 // pred_fallthru
      _
    // Predicated region
    $region66: #{decoder_forward.1} parent=1 // pred_check
      _
    $region67: #{decoder_forward.1} parent=1 // pred_check_branch
      %527 = sbr.rel (0) target = $region69
    $region68: #{decoder_forward.1} parent=1 // pred_region
      _
    $region69: #{decoder_forward.1} parent=1 // pred_fallthru
      _
    // Predicated region
    $region70: #{decoder_forward.1} parent=1 // pred_check
      _
    $region71: #{decoder_forward.1} parent=1 // pred_check_branch
      %529 = sbr.rel (0) target = $region73
    $region72: #{decoder_forward.1} parent=1 // pred_region
      %530 = dma.done [#allocation5], 32
    $region73: #{decoder_forward.1} parent=1 // pred_fallthru
      _
    // Predicated region
    $region74: #{decoder_forward.1} parent=1 // pred_check
      _
    $region75: #{decoder_forward.1} parent=1 // pred_check_branch
      %532 = sbr.rel (0) target = $region77
    $region76: #{decoder_forward.1} parent=1 // pred_region
      _
    $region77: #{decoder_forward.1} parent=1 // pred_fallthru
      _
    // Predicated region
    $region78: #{decoder_forward.1} parent=1 // pred_check
      _
    $region79: #{decoder_forward.1} parent=1 // pred_check_branch
      %534 = sbr.rel (0) target = $region81
    $region80: #{decoder_forward.1} parent=1 // pred_region
      _
    $region81: #{decoder_forward.1} parent=1 // pred_fallthru
      _
    %535 = vsyncpa [#allocation4], 1
    %536 = vsyncpa [#allocation9], 1
    %537 = vsyncpa [#allocation12], 1
    %538 = vsyncpa [#allocation5], 1
    %539 = vsyncpa [#allocation6], 1

</llo_original>
